<compile_context>
chip_gen: v6e
topology: v6e:2x2x1
jax: 0.10.0
libtpu: 0.0.40
codegen_flags: <defaults>
</compile_context>

<pallas_src>
import functools

import jax
import jax.numpy as jnp
import numpy as np
from jax.experimental import pallas as pl
from jax.experimental.pallas import tpu as pltpu


def _divisor_tile(n, target, mult):
    """Largest divisor of n that is <= target and a multiple of `mult`.
    Falls back to n (full extent — always layout-legal) when nothing matches."""
    target = int(max(1, target))
    if n <= target:
        return n
    for t in range(min(target, n), 0, -1):
        if n % t == 0 and t % mult == 0:
            return t
    return n


def _vmem_budgets():
    """Generation-aware scoped-VMEM limit and per-buffer block byte budget."""
    cap = 64 * 1024 * 1024
    try:
        info = pltpu.get_tpu_info()
        cap = int(getattr(info, "vmem_capacity_bytes", cap))
    except Exception:  # interpret mode / unknown host -> conservative default
        pass
    # 128 MiB parts (v5e/v6e): 96 MiB limit, 8 MiB blocks.
    # 64 MiB parts (v7x):      48 MiB limit, 4 MiB blocks.
    vmem_limit = min((cap * 3) // 4, 96 * 1024 * 1024)
    block_budget = max(2 * 1024 * 1024, min(8 * 1024 * 1024, vmem_limit // 12))
    return vmem_limit, block_budget


# ----------------------------------------------------------------------------
# Kernel A: context = mean_j(z) @ (Wp @ Wo) + fused_bias
#   grid = (B, L/ti, L/tj); j (reduction over the 2nd length axis) innermost
#   and "arbitrary"; VMEM (ti, P) accumulator holds the running raw-z sum.
# ----------------------------------------------------------------------------
def _context_kernel(z_ref, wz_ref, b_ref, ctx_ref, acc_ref, *, inv_len, cdt):
    # z_ref: (1, ti, tj, P)  wz_ref: (P, Mp)  b_ref: (1, Mp)
    # ctx_ref: (1, ti, Mp)   acc_ref: (ti, P) f32
    j = pl.program_id(2)

    @pl.when(j == 0)
    def _():
        acc_ref[...] = jnp.zeros_like(acc_ref)

    # Sum raw z over the reduction tile; projection deferred until the mean is
    # complete (linearity of the Linear layer).
    acc_ref[...] += jnp.sum(z_ref[0], axis=1)

    @pl.when(j == pl.num_programs(2) - 1)
    def _():
        z_mean = acc_ref[...] * inv_len                          # (ti, P) f32
        ctx = jnp.dot(z_mean.astype(cdt), wz_ref[...],
                      preferred_element_type=jnp.float32)        # (ti, Mp) f32
        ctx_ref[0] = (ctx + b_ref[...]).astype(ctx_ref.dtype)


# ----------------------------------------------------------------------------
# Kernel B: out = m @ (Wm @ Wo) + context   (bias already folded into context)
#   grid = (B, L/tl, S/ts); s innermost so ctx is fetched once per (b, l).
# ----------------------------------------------------------------------------
def _msa_update_kernel(m_ref, ctx_ref, wm_ref, o_ref, *, cdt):
    # m_ref: (1, ts, tl, M)  ctx_ref: (1, tl, Mp)  wm_ref: (M, Mp)
    # o_ref: (1, ts, tl, Mp)
    ts, tl, M = m_ref.shape[1:]
    Mp = o_ref.shape[-1]
    # Layout-preserving reshape: tile selection guarantees tl % 8 == 0 or ts == 1.
    x = m_ref[0].reshape(ts * tl, M).astype(cdt)
    y = jnp.dot(x, wm_ref[...], preferred_element_type=jnp.float32)  # (ts*tl, Mp)
    y = y.reshape(ts, tl, Mp) + ctx_ref[0][None, :, :]
    o_ref[0] = y.astype(o_ref.dtype)


def pair_msa_update(m, z, params, msa_mask=None, *,
                    compute_dtype=jnp.bfloat16, out_dtype=None, pad_lanes=None):
    """Fused PairMSAUpdate forward.

    m: (B, S, L, M), z: (B, L, L, P).  Returns (B, S, L, M) in `out_dtype`
    (default: m.dtype).  `msa_mask` is accepted but unused — matching the
    PyTorch module's forward.  `compute_dtype` is the MXU operand dtype
    (accumulation is always f32); use jnp.float32 as the accuracy path at
    large msa_dim.
    """
    del msa_mask  # unused by the reference forward
    B, S, L, M = m.shape
    P = z.shape[-1]
    wp_t, bp, wm_t, bm, wo_t, bo = params
    out_dtype = m.dtype if out_dtype is None else out_dtype

    # --- fuse the linear layers once, at high precision (tiny matrices) -----
    hp = jax.lax.Precision.HIGHEST
    w_m = jnp.dot(wm_t, wo_t, precision=hp)                      # (M, M)
    w_z = jnp.dot(wp_t, wo_t, precision=hp)                      # (P, M)
    b_all = (jnp.dot(bm, wo_t, precision=hp)
             + jnp.dot(bp, wo_t, precision=hp) + bo)             # (1, M)

    # --- optional lane-dense (multiple-of-128) output dimension -------------
    if M % 128 == 0:
        Mp = M
    else:
        cand = ((M + 127) // 128) * 128
        if pad_lanes is None:
            pad_lanes = (2 * cand <= 3 * M)   # only if write amplification <= 1.5x
        Mp = cand if pad_lanes else M
    if Mp != M:
        pad = ((0, 0), (0, Mp - M))
        w_m = jnp.pad(w_m, pad)
        w_z = jnp.pad(w_z, pad)
        b_all = jnp.pad(b_all, pad)

    # Hoist the weight casts out of the kernels (fused at f32 above).
    w_m = w_m.astype(compute_dtype)
    w_z = w_z.astype(compute_dtype)
    b_all = b_all.astype(jnp.float32)

    vmem_limit, block_budget = _vmem_budgets()

    # ------------------- kernel A: context term -----------------------------
    tj = _divisor_tile(L, 512, 8)                         # reduction tile
    ti_target = min(block_budget // max(1, tj * P * 4),   # z block bytes
                    block_budget // max(1, Mp * 4))       # ctx block bytes
    ti = _divisor_tile(L, max(8, ti_target), 8)
    if B * (L // ti) < 2:                                 # keep both v7x TCs busy
        smaller = _divisor_tile(L, max(8, ti // 2), 8)
        if smaller < ti:
            ti = smaller
    # TODO(synk): lengths with no multiple-of-8 divisor fall back to a full-L
    # tile; a pl.cdiv grid with a masked ragged tail would bound VMEM there.

    ctx = pl.pallas_call(
        functools.partial(_context_kernel, inv_len=1.0 / L, cdt=compute_dtype),
        out_shape=jax.ShapeDtypeStruct((B, L, Mp), jnp.float32),
        grid_spec=pltpu.PrefetchScalarGridSpec(
            num_scalar_prefetch=0,
            grid=(B, L // ti, L // tj),
            in_specs=[
                pl.BlockSpec((1, ti, tj, P), lambda b, i, j: (b, i, j, 0)),  # z
                pl.BlockSpec((P, Mp), lambda b, i, j: (0, 0)),               # Wp@Wo
                pl.BlockSpec((1, Mp), lambda b, i, j: (0, 0)),               # fused bias
            ],
            out_specs=pl.BlockSpec((1, ti, Mp), lambda b, i, j: (b, i, 0)),
            scratch_shapes=[pltpu.VMEM((ti, P), jnp.float32)],
        ),
        compiler_params=pltpu.CompilerParams(
            dimension_semantics=("parallel", "parallel", "arbitrary"),
            vmem_limit_bytes=vmem_limit),
    )(z, w_z, b_all)

    # ------------------- kernel B: fused MSA update --------------------------
    tl = _divisor_tile(L, 512, 8)
    if tl % 8 != 0:
        ts = 1   # keep the (ts*tl, M) reshape layout-preserving
    else:
        ts = _divisor_tile(S, max(1, block_budget // max(1, tl * Mp * 4)), 1)
    if B * (L // tl) * (S // ts) < 2 and ts > 1:          # v7x megacore sanity
        ts = _divisor_tile(S, max(1, ts // 2), 1)

    out = pl.pallas_call(
        functools.partial(_msa_update_kernel, cdt=compute_dtype),
        out_shape=jax.ShapeDtypeStruct((B, S, L, Mp), out_dtype),
        grid_spec=pltpu.PrefetchScalarGridSpec(
            num_scalar_prefetch=0,
            # s innermost: ctx block index (b, l) is unchanged across the inner
            # loop, so its tile is fetched once per (b, l) instead of per step.
            grid=(B, L // tl, S // ts),
            in_specs=[
                pl.BlockSpec((1, ts, tl, M), lambda b, l, s: (b, s, l, 0)),  # m
                pl.BlockSpec((1, tl, Mp), lambda b, l, s: (b, l, 0)),        # context
                pl.BlockSpec((M, Mp), lambda b, l, s: (0, 0)),               # Wm@Wo
            ],
            out_specs=pl.BlockSpec((1, ts, tl, Mp), lambda b, l, s: (b, s, l, 0)),
        ),
        compiler_params=pltpu.CompilerParams(
            dimension_semantics=("parallel", "parallel", "parallel"),
            vmem_limit_bytes=vmem_limit),
    )(m, ctx, w_m)

    if Mp != M:
        out = out[..., :M]
    return out


def init_params(key, msa_dim, pair_dim):
    """Deterministic nn.Linear-style init.  Weights returned as (in, out)."""
    ks = jax.random.split(key, 6)

    def linear(kw, kb, fan_in, fan_out):
        bound = 1.0 / np.sqrt(fan_in)
        w = jax.random.uniform(kw, (fan_in, fan_out), jnp.float32,
                               minval=-bound, maxval=bound)
        b = jax.random.uniform(kb, (1, fan_out), jnp.float32,
                               minval=-bound, maxval=bound)
        return w, b

    wp_t, bp = linear(ks[0], ks[1], pair_dim, msa_dim)   # pair_proj
    wm_t, bm = linear(ks[2], ks[3], msa_dim, msa_dim)    # msa_proj
    wo_t, bo = linear(ks[4], ks[5], msa_dim, msa_dim)    # output_proj
    return wp_t, bp, wm_t, bm, wo_t, bo


def pair_msa_update_ref(m, z, params):
    """Plain-JAX reference mirroring the PyTorch forward exactly."""
    wp_t, bp, wm_t, bm, wo_t, bo = params
    hp = jax.lax.Precision.HIGHEST
    z_proj = jnp.einsum("bijp,pm->bijm", z, wp_t, precision=hp) + bp[0]
    m_proj = jnp.einsum("bslk,km->bslm", m, wm_t, precision=hp) + bm[0]
    context = jnp.mean(z_proj, axis=2)                  # (B, L, M)
    combined = m_proj + context[:, None, :, :]          # broadcast over num_seqs
    return jnp.einsum("bslk,km->bslm", combined, wo_t, precision=hp) + bo[0]


if __name__ == "__main__":
    batch, num_seqs, length = 2, 4, 8
    msa_dim, pair_dim = 32, 16

    key = jax.random.PRNGKey(0)
    k_m, k_z, k_p = jax.random.split(key, 3)

    m = jax.random.normal(k_m, (batch, num_seqs, length, msa_dim), jnp.float32)
    z = jax.random.normal(k_z, (batch, length, length, pair_dim), jnp.float32)
    msa_mask = jnp.ones((batch, num_seqs, length), jnp.float32)  # unused by forward
    params = init_params(k_p, msa_dim, pair_dim)

    ref = pair_msa_update_ref(m, z, params)

    # Default fast path: bf16 MXU operands, f32 accumulation.
    out = jax.block_until_ready(pair_msa_update(m, z, params, msa_mask))
    np.testing.assert_allclose(np.asarray(out), np.asarray(ref),
                               rtol=5e-2, atol=5e-2)

    # f32 operand path (same kernels, no bf16 cast) — tighter check.
    out_f32 = jax.block_until_ready(
        pair_msa_update(m, z, params, msa_mask, compute_dtype=jnp.float32))
    np.testing.assert_allclose(np.asarray(out_f32), np.asarray(ref),
                               rtol=2e-2, atol=2e-2)

    print("KERNEL_OK")
</pallas_src>

<mosaic_0001>
module attributes {stable_mosaic.version = 11 : i64} {
  func.func @_context_kernel(%arg0: i32, %arg1: i32, %arg2: i32, %arg3: memref<1x8x8x16xf32, #tpu.memory_space<vmem>>, %arg4: memref<16x32xbf16, #tpu.memory_space<vmem>>, %arg5: memref<1x32xf32, #tpu.memory_space<vmem>>, %arg6: memref<1x8x32xf32, #tpu.memory_space<vmem>>, %arg7: memref<8x16xf32, #tpu.memory_space<vmem>>) attributes {dimension_semantics = [#tpu.dimension_semantics<parallel>, #tpu.dimension_semantics<parallel>, #tpu.dimension_semantics<arbitrary>], iteration_bounds = array<i64: 2, 1, 1>, scalar_prefetch = 0 : i64, scratch_operands = 1 : i64, tpu.core_type = #tpu.core_type<tc>, window_params = [{transform_indices = @transform_0, window_bounds = array<i64: 1, 8, 8, 16>}, {pipeline_mode = #tpu.pipeline_mode<synchronous>, transform_indices = @transform_1, window_bounds = array<i64: 16, 32>}, {pipeline_mode = #tpu.pipeline_mode<synchronous>, transform_indices = @transform_2, window_bounds = array<i64: 1, 32>}, {transform_indices = @transform_3, window_bounds = array<i64: 1, 8, 32>}]} {
    %c0_i32 = arith.constant 0 : i32
    %0 = arith.cmpi eq, %arg2, %c0_i32 : i32
    %1 = arith.extui %0 : i1 to i32
    %c0_i32_0 = arith.constant 0 : i32
    %2 = arith.cmpi ne, %1, %c0_i32_0 : i32
    scf.if %2 {
      %cst_10 = arith.constant 0.000000e+00 : f32
      %12 = vector.broadcast %cst_10 : f32 to vector<8x16xf32>
      %c0_11 = arith.constant 0 : index
      %c0_12 = arith.constant 0 : index
      %13 = vector.load %arg7[%c0_11, %c0_12] : memref<8x16xf32, #tpu.memory_space<vmem>>, vector<8x16xf32>
      tpu.vector_store %arg7[%c0_11, %c0_12], %12 {strides = array<i32>} : memref<8x16xf32, #tpu.memory_space<vmem>>, vector<8x16xf32>,
    } else {
    }
    %c0 = arith.constant 0 : index
    %c0_1 = arith.constant 0 : index
    %3 = vector.load %arg7[%c0, %c0_1] : memref<8x16xf32, #tpu.memory_space<vmem>>, vector<8x16xf32>
    %c0_2 = arith.constant 0 : index
    %c0_3 = arith.constant 0 : index
    %c0_4 = arith.constant 0 : index
    %c0_5 = arith.constant 0 : index
    %4 = vector.load %arg3[%c0_2, %c0_3, %c0_4, %c0_5] : memref<1x8x8x16xf32, #tpu.memory_space<vmem>>, vector<1x8x8x16xf32>
    %5 = vector.shape_cast %4 : vector<1x8x8x16xf32> to vector<8x8x16xf32>
    %cst = arith.constant dense<0.000000e+00> : vector<8x16xf32>
    %6 = vector.multi_reduction <add>, %5, %cst [1] : vector<8x8x16xf32> to vector<8x16xf32>
    %7 = arith.addf %3, %6 : vector<8x16xf32>
    %c0_6 = arith.constant 0 : index
    %c0_7 = arith.constant 0 : index
    %8 = vector.load %arg7[%c0_6, %c0_7] : memref<8x16xf32, #tpu.memory_space<vmem>>, vector<8x16xf32>
    tpu.vector_store %arg7[%c0_6, %c0_7], %7 {strides = array<i32>} : memref<8x16xf32, #tpu.memory_space<vmem>>, vector<8x16xf32>,
    %c0_i32_8 = arith.constant 0 : i32
    %9 = arith.cmpi eq, %arg2, %c0_i32_8 : i32
    %10 = arith.extui %9 : i1 to i32
    %c0_i32_9 = arith.constant 0 : i32
    %11 = arith.cmpi ne, %10, %c0_i32_9 : i32
    scf.if %11 {
      %c0_10 = arith.constant 0 : index
      %c0_11 = arith.constant 0 : index
      %12 = vector.load %arg7[%c0_10, %c0_11] : memref<8x16xf32, #tpu.memory_space<vmem>>, vector<8x16xf32>
      %cst_12 = arith.constant 1.250000e-01 : f32
      %13 = vector.broadcast %cst_12 : f32 to vector<8x16xf32>
      %14 = arith.mulf %12, %13 : vector<8x16xf32>
      %15 = arith.truncf %14 : vector<8x16xf32> to vector<8x16xbf16>
      %c0_13 = arith.constant 0 : index
      %c0_14 = arith.constant 0 : index
      %16 = vector.load %arg4[%c0_13, %c0_14] : memref<16x32xbf16, #tpu.memory_space<vmem>>, vector<16x32xbf16>
      %cst_15 = arith.constant dense<0.000000e+00> : vector<8x32xf32>
      %17 = tpu.matmul %15, %16, %cst_15 {dimension_numbers = #tpu.dot_dimension_numbers<[1], [0], [0], [1], [0, 0, 1, 1], [], []>} : vector<8x16xbf16>, vector<16x32xbf16>, vector<8x32xf32> -> vector<8x32xf32>
      %c0_16 = arith.constant 0 : index
      %c0_17 = arith.constant 0 : index
      %18 = vector.load %arg5[%c0_16, %c0_17] : memref<1x32xf32, #tpu.memory_space<vmem>>, vector<1x32xf32>
      %19 = vector.broadcast %18 : vector<1x32xf32> to vector<8x32xf32>
      %20 = arith.addf %17, %19 : vector<8x32xf32>
      %c0_18 = arith.constant 0 : index
      %c0_19 = arith.constant 0 : index
      %c0_20 = arith.constant 0 : index
      %21 = vector.load %arg6[%c0_18, %c0_19, %c0_20] : memref<1x8x32xf32, #tpu.memory_space<vmem>>, vector<1x8x32xf32>
      %22 = vector.shape_cast %21 : vector<1x8x32xf32> to vector<8x32xf32>
      %23 = vector.shape_cast %20 : vector<8x32xf32> to vector<1x8x32xf32>
      tpu.vector_store %arg6[%c0_18, %c0_19, %c0_20], %23 {strides = array<i32>} : memref<1x8x32xf32, #tpu.memory_space<vmem>>, vector<1x8x32xf32>,
    } else {
    }
    return
  }
  func.func @transform_0(%arg0: i32, %arg1: i32, %arg2: i32) -> (i32, i32, i32, i32) {
    %c0_i32 = arith.constant 0 : i32
    %c0_i32_0 = arith.constant 0 : i32
    return %arg0, %arg1, %arg2, %c0_i32 : i32, i32, i32, i32
  }
  func.func @transform_1(%arg0: i32, %arg1: i32, %arg2: i32) -> (i32, i32) {
    %c0_i32 = arith.constant 0 : i32
    %c0_i32_0 = arith.constant 0 : i32
    %c0_i32_1 = arith.constant 0 : i32
    return %c0_i32, %c0_i32_0 : i32, i32
  }
  func.func @transform_2(%arg0: i32, %arg1: i32, %arg2: i32) -> (i32, i32) {
    %c0_i32 = arith.constant 0 : i32
    %c0_i32_0 = arith.constant 0 : i32
    %c0_i32_1 = arith.constant 0 : i32
    return %c0_i32, %c0_i32_0 : i32, i32
  }
  func.func @transform_3(%arg0: i32, %arg1: i32, %arg2: i32) -> (i32, i32, i32) {
    %c0_i32 = arith.constant 0 : i32
    %c0_i32_0 = arith.constant 0 : i32
    return %arg0, %arg1, %c0_i32 : i32, i32, i32
  }
}

</mosaic_0001>

<llo_original>
// kernel: tpu_custom_call.1
$region0: #{tpu_custom_call.1}
  #allocation0 [shape = 'u32[]', space=smem, size = 0x4, offset = 0x4, fixed_abs, tag = 'smem constant byte address 0x4 - core index']
  #allocation1 [shape = 'u32[144,128]{1,0:T(1,128)}', space=vmem, size = 0x12000, scoped, tag = 'internal scratch']
  #allocation2 [shape = 'f32[8,16]{1,0:T(8,128)}', space=vmem, size = 0x1000, scoped, tag = 'scratch operand']
  %s0 = inlined_call_operand.hbm [shape: f32[2,8,8,16], index: 0, kind: input, shape index: {}]
  %s1 = inlined_call_operand.hbm [shape: bf16[16,32], index: 1, kind: input, shape index: {}]
  %s2 = inlined_call_operand.vmem [shape: f32[1,32], index: 2, kind: input, shape index: {}]
  %s3 = inlined_call_operand.hbm [shape: f32[2,8,32], index: 3, kind: output, shape index: {}]
  %s4 = sld [smem:[#allocation0]]
  $region61: #{tpu_custom_call.1} parent=0
    _
  %s6 = ssub.s32 1, %s4
  %s7 = scalar_select 0, %s6, %s4
  $region1: #{tpu_custom_call.1} parent=0
    #allocation3 [shape = 'u8[65536]{0}', space=vmem, size = 0x10000, scoped, tag = 'input window, operand 0']
    #allocation4 [shape = 's32[2]{0}', space=sflag, size = 0x8, scoped, tag = 'scoped memory for tpu_custom_call.1']
    #allocation5 [shape = 's32[2]{0}', space=sflag, size = 0x8, scoped, tag = 'scoped memory for tpu_custom_call.1']
    #allocation6 [shape = 'u8[4096]{0}', space=vmem, size = 0x1000, scoped, tag = 'input window, operand 1, single buffered']
    #allocation7 [shape = 's32[1]{0}', space=sflag, size = 0x4, scoped, tag = 'scoped memory for tpu_custom_call.1']
    #allocation8 [shape = 'u8[8192]{0}', space=vmem, size = 0x2000, scoped, tag = 'output window, operand 0']
    %8 = vsyncpa [#allocation4], 0
    %s9 = scalar_lea.sflag [#allocation4], 1
    %10 = vsyncpa %s9, 0
    %11 = vsyncpa [#allocation7], 0
    %12 = vsyncpa [#allocation5], 0
    %s13 = scalar_lea.sflag [#allocation5], 1
    %14 = vsyncpa %s13, 0
    loop: start=0, step=1, limit=4
    $region2: #{tpu_custom_call.1} parent=1 // loop_pre_header
      _
    $region3: #{tpu_custom_call.1} parent=1 // loop_header
      %s16 = sphi 0, %s20
      %p17 = scmp.ge.s32.totalorder %s16, 4
      %s23 = sphi 0, %s42
      %s24 = sphi 0, %s38
      %s25 = sphi 0, %s34
      %s26 = sphi 0, %s23
      %s27 = sphi 0, %s24
      %s28 = sphi 0, %s25
      %s29 = sphi 0, %s26
      %s30 = sphi 0, %s27
      %s31 = sphi 0, %s28
      %s49 = sphi 0, %s51
      %s52 = sphi 0, %s49
      %s53 = sphi 0, %s52
      %s69 = sphi 0, %s53
      %s73 = sphi 0, %s73
      %s75 = sphi 0, %s73
      %s76 = sphi 0, %s75
      %s90 = sphi 0, %s76
      %s94 = sphi 0, %s94
      %s96 = sphi 0, %s94
      %s97 = sphi 0, %s96
      %s111 = sphi 0, %s97
      %s119 = sphi 0, %s121
      %s122 = sphi 0, %s119
      %s123 = sphi 0, %s122
      %s139 = sphi 0, %s123
    $region4: #{tpu_custom_call.1} parent=1 // loop_header_branch
      %19 = sbr.rel (%p17) target = $region8
    $region5: #{tpu_custom_call.1} parent=1 // loop_body
      %s21 = ssub.s32 %s16, 1
      %s22 = ssub.s32 %s16, 2
      %s32 = sadd.s32 1, %s25
      %p33 = scmp.ge.s32.totalorder %s32, 1
      %s34 = scalar_select %p33, 0, %s32
      %s35 = sadd.s32 1, %s24
      %s36 = scalar_select %p33, %s35, %s24
      %p37 = scmp.ge.s32.totalorder %s36, 1
      %s38 = scalar_select %p37, 0, %s36
      %s39 = sadd.s32 1, %s23
      %s40 = scalar_select %p37, %s39, %s23
      %p41 = scmp.ge.s32.totalorder %s40, 2
      %s42 = scalar_select %p41, 0, %s40
      %s43 = ssub.s32 %s23, %s42
      %s44 = ssub.s32 %s24, %s38
      %s45 = sor.u32 %s43, %s44
      %s46 = ssub.s32 %s25, %s34
      %s47 = sor.u32 %s45, %s46
      %p48 = scmp.eq.s32.totalorder %s47, 0
      %s50 = sadd.s32 %s49, 1
      %s51 = scalar_select %p48, %s49, %s50
      %p54 = pneg %p48
      %p55 = scmp.eq.s32.totalorder %s16, 1
      %p56 = por %p54, %p55
      %p57 = scmp.ne.s32.totalorder %s49, %s52
      %p58 = scmp.eq.s32.totalorder %s16, 0
      %p59 = por %p57, %p58
      %p60 = scmp.ne.s32.totalorder %s49, %s52
      %p61 = scmp.eq.s32.totalorder %s21, 1
      %p62 = por %p60, %p61
      %p63 = scmp.ne.s32.totalorder %s52, %s53
      %p64 = scmp.eq.s32.totalorder %s21, 0
      %p65 = por %p63, %p64
      %p66 = scmp.ne.s32.totalorder %s52, %s53
      %p67 = scmp.eq.s32.totalorder %s22, 1
      %p68 = por %p66, %p67
      %p70 = scmp.ne.s32.totalorder %s53, %s69
      %p71 = scmp.eq.s32.totalorder %s22, 0
      %p72 = por %p70, %p71
      %s74 = sadd.s32 %s73, 1
      %p77 = scmp.eq.s32.totalorder %s16, 1
      %p78 = scmp.ne.s32.totalorder %s73, %s75
      %p79 = scmp.eq.s32.totalorder %s16, 0
      %p80 = por %p78, %p79
      %p81 = scmp.ne.s32.totalorder %s73, %s75
      %p82 = scmp.eq.s32.totalorder %s21, 1
      %p83 = por %p81, %p82
      %p84 = scmp.ne.s32.totalorder %s75, %s76
      %p85 = scmp.eq.s32.totalorder %s21, 0
      %p86 = por %p84, %p85
      %p87 = scmp.ne.s32.totalorder %s75, %s76
      %p88 = scmp.eq.s32.totalorder %s22, 1
      %p89 = por %p87, %p88
      %p91 = scmp.ne.s32.totalorder %s76, %s90
      %p92 = scmp.eq.s32.totalorder %s22, 0
      %p93 = por %p91, %p92
      %s95 = sadd.s32 %s94, 1
      %p98 = scmp.eq.s32.totalorder %s16, 1
      %p99 = scmp.ne.s32.totalorder %s94, %s96
      %p100 = scmp.eq.s32.totalorder %s16, 0
      %p101 = por %p99, %p100
      %p102 = scmp.ne.s32.totalorder %s94, %s96
      %p103 = scmp.eq.s32.totalorder %s21, 1
      %p104 = por %p102, %p103
      %p105 = scmp.ne.s32.totalorder %s96, %s97
      %p106 = scmp.eq.s32.totalorder %s21, 0
      %p107 = por %p105, %p106
      %p108 = scmp.ne.s32.totalorder %s96, %s97
      %p109 = scmp.eq.s32.totalorder %s22, 1
      %p110 = por %p108, %p109
      %p112 = scmp.ne.s32.totalorder %s97, %s111
      %p113 = scmp.eq.s32.totalorder %s22, 0
      %p114 = por %p112, %p113
      %s115 = ssub.s32 %s23, %s42
      %s116 = ssub.s32 %s24, %s38
      %s117 = sor.u32 %s115, %s116
      %p118 = scmp.eq.s32.totalorder %s117, 0
      %s120 = sadd.s32 %s119, 1
      %s121 = scalar_select %p118, %s119, %s120
      %p124 = pneg %p118
      %p125 = scmp.eq.s32.totalorder %s16, 1
      %p126 = por %p124, %p125
      %p127 = scmp.ne.s32.totalorder %s119, %s122
      %p128 = scmp.eq.s32.totalorder %s16, 0
      %p129 = por %p127, %p128
      %p130 = scmp.ne.s32.totalorder %s119, %s122
      %p131 = scmp.eq.s32.totalorder %s21, 1
      %p132 = por %p130, %p131
      %p133 = scmp.ne.s32.totalorder %s122, %s123
      %p134 = scmp.eq.s32.totalorder %s21, 0
      %p135 = por %p133, %p134
      %p136 = scmp.ne.s32.totalorder %s122, %s123
      %p137 = scmp.eq.s32.totalorder %s22, 1
      %p138 = por %p136, %p137
      %p140 = scmp.ne.s32.totalorder %s123, %s139
      %p141 = scmp.eq.s32.totalorder %s22, 0
      %p142 = por %p140, %p141
      %p143 = scmp.le.s32.totalorder 1, %s16
      %p144 = scmp.lt.s32.totalorder %s16, 3
      %p145 = pnand %p143, %p144
      %p146 = pneg %p145
      // Predicated region
      $region9: #{tpu_custom_call.1} parent=5 // pred_check
        _
      $region10: #{tpu_custom_call.1} parent=5 // pred_check_branch
        %148 = sbr.rel (%p145) target = $region12
      $region11: #{tpu_custom_call.1} parent=5 // pred_region
        %s149 = ssub.s32 %s16, 1
        // Predicated region
        $region13: #{tpu_custom_call.1} parent=11 // pred_check
          %p150 = pneg %p86
        $region14: #{tpu_custom_call.1} parent=11 // pred_check_branch
          %152 = sbr.rel (%p150) target = $region16
        $region15: #{tpu_custom_call.1} parent=11 // pred_region
          %s154 = ssub.s32 128, 128
          %155 = vsyncadd [#allocation7], %s154
          %s156 = sshll.u32 [#allocation6], 4
          %s157 = int_to_ptr.vmem [resolvable:$true] %s156
          %162 = dma.hbm_to_vmem [thread:$0]  %s1, 128, %s157, [#allocation7], 64, 64, 4
        $region16: #{tpu_custom_call.1} parent=11 // pred_fallthru
          _
        // Predicated region
        $region17: #{tpu_custom_call.1} parent=11 // pred_check
          %p163 = pneg %p107
        $region18: #{tpu_custom_call.1} parent=11 // pred_check_branch
          %165 = sbr.rel (%p163) target = $region20
        $region19: #{tpu_custom_call.1} parent=11 // pred_region
          _
        $region20: #{tpu_custom_call.1} parent=11 // pred_fallthru
          _
      $region12: #{tpu_custom_call.1} parent=5 // pred_fallthru
        _
      %p166 = scmp.lt.s32.totalorder %s16, 2
      // Predicated region
      $region21: #{tpu_custom_call.1} parent=5 // pred_check
        %p167 = pneg %p166
      $region22: #{tpu_custom_call.1} parent=5 // pred_check_branch
        %169 = sbr.rel (%p167) target = $region24
      $region23: #{tpu_custom_call.1} parent=5 // pred_region
        // Predicated region
        $region25: #{tpu_custom_call.1} parent=23 // pred_check
          %p170 = pneg %p59
        $region26: #{tpu_custom_call.1} parent=23 // pred_check_branch
          %172 = sbr.rel (%p170) target = $region28
        $region27: #{tpu_custom_call.1} parent=23 // pred_region
          %s173 = sand.u32 %s49, 1
          %s174 = scalar_lea.sflag [#allocation4], %s173
          %s175 = sand.u32 %s49, 1
          %s176 = smul.addr %s175, 64
          %s177 = scalar_lea.vmem [#allocation3], %s176
          %s178 = smul.u32 8, %s24
          %s180 = ssub.s32 1024, 1024
          %181 = vsyncadd %s174, %s180
          %s182 = sadd.s32 %s25, %s178
          %s183 = smul.addr %s23, 8
          %s184 = sadd.s32 %s182, %s183
          %s185 = smul.addr %s184, 128
          %s186 = scalar_lea.hbm %s0, %s185
          %s187 = sshll.u32 %s177, 4
          %s188 = int_to_ptr.vmem [resolvable:$true] %s187
          %193 = dma.hbm_to_vmem [thread:$0]  %s186, 1024, %s188, %s174, 128, 128, 8
        $region28: #{tpu_custom_call.1} parent=23 // pred_fallthru
          _
      $region24: #{tpu_custom_call.1} parent=5 // pred_fallthru
        _
      %p194 = scmp.le.s32.totalorder 1, %s16
      %p195 = scmp.lt.s32.totalorder %s16, 3
      %p196 = pnand %p194, %p195
      %p197 = pneg %p196
      // Predicated region
      $region29: #{tpu_custom_call.1} parent=5 // pred_check
        _
      $region30: #{tpu_custom_call.1} parent=5 // pred_check_branch
        %199 = sbr.rel (%p196) target = $region32
      $region31: #{tpu_custom_call.1} parent=5 // pred_region
        %s200 = ssub.s32 %s16, 1
        %s201 = sand.u32 %s52, 1
        %s202 = scalar_lea.sflag [#allocation4], %s201
        %s203 = sand.u32 %s52, 1
        %s204 = smul.addr %s203, 64
        %s205 = scalar_lea.vmem [#allocation3], %s204
        // Predicated region
        $region33: #{tpu_custom_call.1} parent=31 // pred_check
          %p206 = pneg %p65
        $region34: #{tpu_custom_call.1} parent=31 // pred_check_branch
          %208 = sbr.rel (%p206) target = $region36
        $region35: #{tpu_custom_call.1} parent=31 // pred_region
          %209 = dma.done %s202, 1024
        $region36: #{tpu_custom_call.1} parent=31 // pred_fallthru
          _
        // Predicated region
        $region37: #{tpu_custom_call.1} parent=31 // pred_check
          %p210 = pneg %p86
        $region38: #{tpu_custom_call.1} parent=31 // pred_check_branch
          %212 = sbr.rel (%p210) target = $region40
        $region39: #{tpu_custom_call.1} parent=31 // pred_region
          %213 = dma.done [#allocation7], 128
        $region40: #{tpu_custom_call.1} parent=31 // pred_fallthru
          _
        %s214 = sand.u32 %s52, 1
        %s215 = scalar_lea.sflag [#allocation4], %s214
        %s216 = sand.u32 %s52, 1
        %s217 = smul.addr %s216, 64
        %s218 = scalar_lea.vmem [#allocation3], %s217
        %p219 = pneg %p65
        %p220 = pneg %p62
        %p221 = pneg %p86
        %p222 = pneg %p83
        %p223 = pneg %p107
        %p224 = pneg %p104
        %p225 = pneg %p135
        %p226 = pneg %p132
        %s227 = sand.u32 %s122, 1
        %s228 = scalar_lea.sflag [#allocation5], %s227
        %s229 = sand.u32 %s122, 1
        %s230 = smul.addr %s229, 8
        %s231 = scalar_lea.vmem [#allocation8], %s230
        %s232 = smul.u32 8, %s27
        %p234 = scmp.eq.s32.totalorder %s28, 0
        // Predicated region
        $region41: #{tpu_custom_call.1} parent=31 // pred_check
          %p235 = pneg %p234
        $region42: #{tpu_custom_call.1} parent=31 // pred_check_branch
          %237 = sbr.rel (%p235) target = $region44
        $region43: #{tpu_custom_call.1} parent=31 // pred_region
          %vm238 = vcmask 130048
          %239 = vst.msk [vmem:[#allocation2] sm:$0xff] %vm238, 0.0
        $region44: #{tpu_custom_call.1} parent=31 // pred_fallthru
          _
        %v240 = vld [vmem:[#allocation2] sm:$0xff]
        %v241 = vld [vmem:[%s205] sm:$0xff]
        %v242 = vld [vmem:[%s205 + $0x8] sm:$0xff]
        %v243 = vld [vmem:[%s205 + $0x10] sm:$0xff]
        %v244 = vld [vmem:[%s205 + $0x18] sm:$0xff]
        %v245 = vld [vmem:[%s205 + $0x20] sm:$0xff]
        %v246 = vld [vmem:[%s205 + $0x28] sm:$0xff]
        %v247 = vld [vmem:[%s205 + $0x30] sm:$0xff]
        %v248 = vld [vmem:[%s205 + $0x38] sm:$0xff]
        %vm249 = vcmask 130048
        %v250 = vsel %vm249, %v241, 0.0
        %v251 = vrot.slane %v250, 4
        %v252 = vadd.f32 %v250, %v251
        %v253 = vrot.slane %v252, 2
        %v254 = vadd.f32 %v252, %v253
        %v255 = vrot.slane %v254, 1
        %v256 = vadd.f32 %v254, %v255
        %v257 = vsel %vm249, %v242, 0.0
        %v258 = vrot.slane %v257, 4
        %v259 = vadd.f32 %v257, %v258
        %v260 = vrot.slane %v259, 2
        %v261 = vadd.f32 %v259, %v260
        %v262 = vrot.slane %v261, 1
        %v263 = vadd.f32 %v261, %v262
        %v264 = vsel %vm249, %v243, 0.0
        %v265 = vrot.slane %v264, 4
        %v266 = vadd.f32 %v264, %v265
        %v267 = vrot.slane %v266, 2
        %v268 = vadd.f32 %v266, %v267
        %v269 = vrot.slane %v268, 1
        %v270 = vadd.f32 %v268, %v269
        %v271 = vsel %vm249, %v244, 0.0
        %v272 = vrot.slane %v271, 4
        %v273 = vadd.f32 %v271, %v272
        %v274 = vrot.slane %v273, 2
        %v275 = vadd.f32 %v273, %v274
        %v276 = vrot.slane %v275, 1
        %v277 = vadd.f32 %v275, %v276
        %v278 = vsel %vm249, %v245, 0.0
        %v279 = vrot.slane %v278, 4
        %v280 = vadd.f32 %v278, %v279
        %v281 = vrot.slane %v280, 2
        %v282 = vadd.f32 %v280, %v281
        %v283 = vrot.slane %v282, 1
        %v284 = vadd.f32 %v282, %v283
        %v285 = vsel %vm249, %v246, 0.0
        %v286 = vrot.slane %v285, 4
        %v287 = vadd.f32 %v285, %v286
        %v288 = vrot.slane %v287, 2
        %v289 = vadd.f32 %v287, %v288
        %v290 = vrot.slane %v289, 1
        %v291 = vadd.f32 %v289, %v290
        %v292 = vsel %vm249, %v247, 0.0
        %v293 = vrot.slane %v292, 4
        %v294 = vadd.f32 %v292, %v293
        %v295 = vrot.slane %v294, 2
        %v296 = vadd.f32 %v294, %v295
        %v297 = vrot.slane %v296, 1
        %v298 = vadd.f32 %v296, %v297
        %v299 = vsel %vm249, %v248, 0.0
        %v300 = vrot.slane %v299, 4
        %v301 = vadd.f32 %v299, %v300
        %v302 = vrot.slane %v301, 2
        %v303 = vadd.f32 %v301, %v302
        %v304 = vrot.slane %v303, 1
        %v305 = vadd.f32 %v303, %v304
        %vm314 = vcmask 1041409
        %v315 = vsel %vm314, %v263, %v256
        %vm316 = vcmask 1042434
        %v317 = vsel %vm316, %v270, %v315
        %vm318 = vcmask 1043459
        %v319 = vsel %vm318, %v277, %v317
        %vm320 = vcmask 1044484
        %v321 = vsel %vm320, %v284, %v319
        %vm322 = vcmask 1045509
        %v323 = vsel %vm322, %v291, %v321
        %vm324 = vcmask 1046534
        %v325 = vsel %vm324, %v298, %v323
        %vm326 = vcmask 1047559
        %v327 = vsel %vm326, %v305, %v325
        %v329 = vadd.f32 %v240, %v327
        %330 = vst.msk [vmem:[#allocation2] sm:$0xff] %vm249, %v329
        // Predicated region
        $region45: #{tpu_custom_call.1} parent=31 // pred_check
          %p331 = pneg %p234
        $region46: #{tpu_custom_call.1} parent=31 // pred_check_branch
          %333 = sbr.rel (%p331) target = $region48
        $region47: #{tpu_custom_call.1} parent=31 // pred_region
          %v334 = vld [vmem:[#allocation2] sm:$0xff]
          %v335 = vmul.f32 %v334, 0.125
          %v336 = vpack.c.bf16 %v335, %v335
          %v337 = vld [vmem:[#allocation6] sm:$0xf]
          %v338 = vld [vmem:[#allocation6 + $0x4] sm:$0xf]
          %v339 = vld [vmem:[%s2] sm:$0x1]
          %v341 = vlaneseq
          %v342 = vshrl.u32 %v341, 7
          %v343 = vsub.s32 0, %v342
          %v344 = vrot.slane %v339, %v343
          %v348 = vunpack.c.l.b16 %v337
          %v349 = vunpack.c.l.b16 %v338
          %v350 = vpack.c.b16 %v349, %v348
          %v353 = vsel %vm249, %v336, 0
          %355 = vmatprep.subr.bf16.mxu0 0
          %356 = vmatpush1.bf16.msra.mxu0 0
          %357 = vmatprep.subr.bf16.mxu0 0
          %358 = vmatpush1.bf16.msra.mxu0 0
          %359 = vmatprep.subr.bf16.mxu0 0
          %360 = vmatpush1.bf16.msra.mxu0 0
          %361 = vmatprep.subr.bf16.mxu0 0
          %362 = vmatpush1.bf16.msra.mxu0 0
          %363 = vmatprep.subr.bf16.mxu0 0
          %364 = vmatpush1.bf16.msra.mxu0 0
          %365 = vmatprep.subr.bf16.mxu0 0
          %366 = vmatpush1.bf16.msra.mxu0 0
          %367 = vmatprep.subr.bf16.mxu0 0
          %368 = vmatpush1.bf16.msra.mxu0 0
          %369 = vmatprep.subr.bf16.mxu0 0
          %370 = vmatpush1.bf16.msra.mxu0 %v350
          %371 = vmatprep.subr.bf16.mxu0 0
          %372 = vmatpush2.bf16.msra.mxu0 0
          %373 = vmatprep.subr.bf16.mxu0 0
          %374 = vmatpush2.bf16.msra.mxu0 0
          %375 = vmatprep.subr.bf16.mxu0 0
          %376 = vmatpush2.bf16.msra.mxu0 0
          %377 = vmatprep.subr.bf16.mxu0 0
          %378 = vmatpush2.bf16.msra.mxu0 0
          %379 = vmatprep.subr.bf16.mxu0 0
          %380 = vmatpush2.bf16.msra.mxu0 0
          %381 = vmatprep.subr.bf16.mxu0 0
          %382 = vmatpush2.bf16.msra.mxu0 0
          %383 = vmatprep.subr.bf16.mxu0 0
          %384 = vmatpush2.bf16.msra.mxu0 0
          %385 = vmatprep.subr.bf16.mxu0 0
          %386 = vmatpush2.bf16.msra.mxu0 0
          %387 = vmatprep.mubr.bf16.mxu0 0
          %388 = vmatmul.mubr.bf16.gmra.mxu0 %v353
          %v389 = vpop.f32.mrf.mxu0
          %v390 = vadd.f32 %v344, %v389
          %v391 = vpop.f32.mrf.mxu0
          %v392 = vpop.f32.mrf.mxu0
          %v393 = vpop.f32.mrf.mxu0
          %394 = vdwg.mxu0
          %vm395 = vcmask 261120
          %396 = vst.msk [vmem:[%s231] sm:$0xff] %vm395, %v390
        $region48: #{tpu_custom_call.1} parent=31 // pred_fallthru
          _
        %s397 = sand.u32 %s122, 1
        %s398 = scalar_lea.sflag [#allocation5], %s397
        %s399 = sand.u32 %s122, 1
        %s400 = smul.addr %s399, 8
        %s401 = scalar_lea.vmem [#allocation8], %s400
        // Predicated region
        $region49: #{tpu_custom_call.1} parent=31 // pred_check
          %p402 = pneg %p132
        $region50: #{tpu_custom_call.1} parent=31 // pred_check_branch
          %404 = sbr.rel (%p402) target = $region52
        $region51: #{tpu_custom_call.1} parent=31 // pred_region
          %s406 = ssub.s32 128, 128
          %407 = vsyncadd %s398, %s406
          %s408 = sadd.s32 %s27, %s26
          %s409 = smul.addr %s408, 128
          %s410 = scalar_lea.hbm %s3, %s409
          %s412 = sshll.u32 %s401, 4
          %s413 = int_to_ptr.vmem [resolvable:$true] %s412
          %415 = dma.vmem_to_hbm [thread:$0]  %s413, 128, %s410, %s398
        $region52: #{tpu_custom_call.1} parent=31 // pred_fallthru
          _
      $region32: #{tpu_custom_call.1} parent=5 // pred_fallthru
        _
      %p416 = scmp.le.s32.totalorder 2, %s16
      // Predicated region
      $region53: #{tpu_custom_call.1} parent=5 // pred_check
        %p417 = pneg %p416
      $region54: #{tpu_custom_call.1} parent=5 // pred_check_branch
        %419 = sbr.rel (%p417) target = $region56
      $region55: #{tpu_custom_call.1} parent=5 // pred_region
        %s420 = ssub.s32 %s16, 2
        // Predicated region
        $region57: #{tpu_custom_call.1} parent=55 // pred_check
          %p421 = pneg %p138
        $region58: #{tpu_custom_call.1} parent=55 // pred_check_branch
          %423 = sbr.rel (%p421) target = $region60
        $region59: #{tpu_custom_call.1} parent=55 // pred_region
          %s424 = sand.u32 %s123, 1
          %s425 = scalar_lea.sflag [#allocation5], %s424
          %s426 = sand.u32 %s123, 1
          %s427 = smul.addr %s426, 8
          %s428 = scalar_lea.vmem [#allocation8], %s427
          %429 = dma.done %s425, 128
        $region60: #{tpu_custom_call.1} parent=55 // pred_fallthru
          _
      $region56: #{tpu_custom_call.1} parent=5 // pred_fallthru
        _
    $region6: #{tpu_custom_call.1} parent=1 // loop_footer
      %s20 = sadd.s32 1, %s16
    $region7: #{tpu_custom_call.1} parent=1 // loop_footer_branch
      %15 = sbr.rel target = $region3
    $region8: #{tpu_custom_call.1} parent=1 // loop_exit
      _
    %430 = vsyncpa [#allocation4], 1
    %s431 = scalar_lea.sflag [#allocation4], 1
    %432 = vsyncpa %s431, 1
    %433 = vsyncpa [#allocation7], 1
    %434 = vsyncpa [#allocation5], 1
    %s435 = scalar_lea.sflag [#allocation5], 1
    %436 = vsyncpa %s435, 1

</llo_original>
